<compile_context>
chip_gen: v7x
topology: tpu7x:2x2x1
jax: 0.10.0
libtpu: 0.0.40
codegen_flags: <defaults>
</compile_context>

<pallas_src>
import math

import jax
import jax.numpy as jnp
from jax.experimental import pallas as pl
from jax.experimental.pallas import tpu as pltpu


# ----------------------------------------------------------------------------- helpers
def _softplus(x):
    # F.softplus(x, beta=1, threshold=20); clamp the exp argument so the branch that
    # jnp.where discards never produces inf.
    return jnp.where(x > 20.0, x, jnp.log1p(jnp.exp(jnp.minimum(x, 20.0))))


def _round_up(a, m):
    return (a + m - 1) // m * m


def _pad2(a, rows, cols):
    pr, pc = rows - a.shape[0], cols - a.shape[1]
    if pr == 0 and pc == 0:
        return a
    return jnp.pad(a, ((0, pr), (0, pc)))


# ----------------------------------------------------------------------------- kernels
def _logits_kernel(x_ref, x2_ref, wmu_ref, varw_ref, actb_ref, epsw_ref, out_ref):
    # act_weight_mu  = x @ weight_mu
    act_mu = jnp.dot(x_ref[...], wmu_ref[...], preferred_element_type=jnp.float32)
    # act_weight_std = sqrt(x^2 @ std_w^2)          (x^2, std_w^2 precomputed in wrapper)
    act_var = jnp.dot(x2_ref[...], varw_ref[...], preferred_element_type=jnp.float32)
    out_ref[...] = (act_mu + jnp.sqrt(act_var) * epsw_ref[...]
                    + actb_ref[...]).astype(out_ref.dtype)


def _make_kld_kernel(inv_ps2):
    # Accumulate sum(-2*log(std_w) + (std_w^2 + mu^2)/ps^2) over n_in tiles.
    def kld_kernel(wmu_ref, wrho_ref, out_ref, acc_ref):
        k = pl.program_id(0)

        @pl.when(k == 0)
        def _():
            acc_ref[0] = 0.0

        wmu = wmu_ref[...]
        std_w = 1e-6 + _softplus(wrho_ref[...])
        acc_ref[0] += jnp.sum(-2.0 * jnp.log(std_w)
                              + (std_w * std_w + wmu * wmu) * inv_ps2)

        @pl.when(k == pl.num_programs(0) - 1)
        def _():
            out_ref[0, 0] = acc_ref[0]

    return kld_kernel


# ----------------------------------------------------------------------------- wrapper
def bbp_output_layer(x, weight_mu, weight_rho, bias_mu, bias_rho, eps_w, eps_b,
                     prior_sigma=0.1, *, block_b=256, block_n=256, use_bf16=True):
    """Pallas forward of BBPOutputLayer.

    x:          (B, n_in)      float
    weight_mu:  (n_in, n_out)
    weight_rho: (n_in, n_out)
    bias_mu:    (n_out,)
    bias_rho:   (n_out,)
    eps_w:      (B, n_out)     ~ N(0,1)   (torch samples this inside forward)
    eps_b:      (n_out,)       ~ N(0,1)
    Returns (logits (B, n_out) float32, kld scalar float32).
    """
    x = jnp.asarray(x, jnp.float32)
    weight_mu = jnp.asarray(weight_mu, jnp.float32)
    weight_rho = jnp.asarray(weight_rho, jnp.float32)
    bias_mu = jnp.asarray(bias_mu, jnp.float32)
    bias_rho = jnp.asarray(bias_rho, jnp.float32)
    eps_w = jnp.asarray(eps_w, jnp.float32)
    eps_b = jnp.asarray(eps_b, jnp.float32)

    B, n_in = x.shape
    n_out = weight_mu.shape[1]
    io_dtype = jnp.bfloat16 if use_bf16 else jnp.float32
    itemsize = 2 if use_bf16 else 4

    ps = float(prior_sigma)
    inv_ps2 = 1.0 / (ps * ps)

    # ------------------------------------------------------------------ KLD (weights)
    # Tiled over n_in ("arbitrary" axis) with an SMEM scalar accumulator so arbitrarily
    # large layers never exceed VMEM.  Padded rows (rho=0, mu=0) are subtracted exactly.
    tk = min(_round_up(n_in, 8), 1024)
    n_in_k = _round_up(n_in, tk)
    nk = n_in_k // tk
    pad_rows = n_in_k - n_in

    raw_w = pl.pallas_call(
        _make_kld_kernel(inv_ps2),
        out_shape=jax.ShapeDtypeStruct((1, 1), jnp.float32),
        grid=(nk,),
        in_specs=[pl.BlockSpec((tk, n_out), lambda k: (k, 0)),
                  pl.BlockSpec((tk, n_out), lambda k: (k, 0))],
        out_specs=pl.BlockSpec((1, 1), lambda k: (0, 0),
                               memory_space=pltpu.MemorySpace.SMEM),
        scratch_shapes=[pltpu.SMEM((1,), jnp.float32)],
        compiler_params=pltpu.CompilerParams(dimension_semantics=("arbitrary",)),
    )(_pad2(weight_mu, n_in_k, n_out), _pad2(weight_rho, n_in_k, n_out))[0, 0]

    if pad_rows:
        # Remove the contribution of the zero-padded rows (rho = 0, mu = 0).
        std0 = 1e-6 + jax.nn.softplus(jnp.float32(0.0))
        f0 = -2.0 * jnp.log(std0) + (std0 * std0) * inv_ps2
        raw_w = raw_w - jnp.float32(pad_rows * n_out) * f0

    const_w = float(n_in * n_out) * (2.0 * math.log(ps) - 1.0)
    kld_w = 0.5 * (raw_w + const_w)

    # bias KLD + bias sample: O(n_out), done in the wrapper (negligible).
    std_b = 1e-6 + jax.nn.softplus(bias_rho)
    kld_b = 0.5 * jnp.sum(2.0 * jnp.log(0.1 / std_b) - 1.0
                          + (std_b / 0.1) ** 2 + (bias_mu / 0.1) ** 2)
    kld = kld_w + kld_b

    act_b = (bias_mu + std_b * eps_b).reshape(1, n_out)

    # ------------------------------------------------------------------ tile sizes
    n_out_p = _round_up(n_out, 128)
    tn = min(_round_up(block_n, 128), n_out_p)
    n_out_p = _round_up(n_out_p, tn)
    nj = n_out_p // tn

    n_in_p = _round_up(n_in, 8)
    b_p0 = _round_up(B, 8)
    tb = min(_round_up(block_b, 8), b_p0)

    # megacore: when n_out fits a single tile, ensure the batch axis has >= 2 tiles
    # so both v7x TensorCores get work.
    if nj == 1 and b_p0 > 8:
        tb = min(tb, _round_up((b_p0 + 1) // 2, 8))

    # VMEM budget: double-buffered (x, x2, wmu, var_w, act_b, eps_w, out).
    def _footprint(tb_):
        return 2 * (2 * tb_ * n_in_p * itemsize        # x, x2
                    + 2 * n_in_p * tn * itemsize       # weight_mu, var_w
                    + tn * 4                           # act_b
                    + 2 * tb_ * tn * 4)                # eps_w, logits

    try:
        vmem_cap = int(pltpu.get_tpu_info().vmem_capacity_bytes)
    except Exception:
        vmem_cap = 64 * 1024 * 1024                    # conservative (v7x per-TC)
    budget = int(0.8 * vmem_cap)

    est = _footprint(tb)
    while est > budget and tb > 8:
        tb = _round_up(max(8, tb // 2), 8)
        est = _footprint(tb)
    vmem_limit = int(min(max(int(1.5 * est), 16 * 1024 * 1024), budget))

    b_p = _round_up(b_p0, tb)
    ni = b_p // tb

    # ------------------------------------------------------------------ operand prep
    # TODO(synk): when parameters are reused across calls, hoist wmu_in / varw_in
    # (the softplus/square/cast/pad of the weights) out of the per-call path.
    x_in = _pad2(x, b_p, n_in_p).astype(io_dtype)
    x2_in = _pad2(x * x, b_p, n_in_p).astype(io_dtype)
    wmu_in = _pad2(weight_mu, n_in_p, n_out_p).astype(io_dtype)
    std_w = 1e-6 + jax.nn.softplus(weight_rho)
    varw_in = _pad2(std_w * std_w, n_in_p, n_out_p).astype(io_dtype)
    actb_in = _pad2(act_b, 1, n_out_p)
    epsw_in = _pad2(eps_w, b_p, n_out_p)

    # ------------------------------------------------------------------ grid / residency
    # Keep the operand with the most reuse resident (its index_map ignores the inner axis).
    weights_resident = (nj - 1) * b_p <= (ni - 1) * n_out_p
    if weights_resident:
        grid = (nj, ni)                                  # batch innermost
        x_map = lambda j, i: (i, 0)
        w_map = lambda j, i: (0, j)
        b_map = lambda j, i: (0, j)
        o_map = lambda j, i: (i, j)
    else:
        grid = (ni, nj)                                  # n_out innermost, x resident
        x_map = lambda i, j: (i, 0)
        w_map = lambda i, j: (0, j)
        b_map = lambda i, j: (0, j)
        o_map = lambda i, j: (i, j)

    logits_p = pl.pallas_call(
        _logits_kernel,
        out_shape=jax.ShapeDtypeStruct((b_p, n_out_p), jnp.float32),
        grid=grid,
        in_specs=[
            pl.BlockSpec((tb, n_in_p), x_map),           # x
            pl.BlockSpec((tb, n_in_p), x_map),           # x^2
            pl.BlockSpec((n_in_p, tn), w_map),           # weight_mu
            pl.BlockSpec((n_in_p, tn), w_map),           # var_w = std_w^2
            pl.BlockSpec((1, tn), b_map),                # act_b (bias sample)
            pl.BlockSpec((tb, tn), o_map),               # eps_w
        ],
        out_specs=pl.BlockSpec((tb, tn), o_map),
        compiler_params=pltpu.CompilerParams(
            dimension_semantics=("parallel", "parallel"),
            vmem_limit_bytes=vmem_limit,
        ),
    )(x_in, x2_in, wmu_in, varw_in, actb_in, epsw_in)

    if b_p == B and n_out_p == n_out:
        logits = logits_p
    else:
        logits = logits_p[:B, :n_out]
    return logits, kld


# ----------------------------------------------------------------------------- reference
def reference(x, weight_mu, weight_rho, bias_mu, bias_rho, eps_w, eps_b,
              prior_sigma=0.1):
    """Pure-JAX reference mirroring the PyTorch forward."""
    std_w = 1e-6 + jax.nn.softplus(weight_rho)
    std_b = 1e-6 + jax.nn.softplus(bias_rho)
    act_mu = x @ weight_mu
    act_std = jnp.sqrt((x ** 2) @ (std_w ** 2))
    logits = act_mu + act_std * eps_w + (bias_mu + std_b * eps_b)[None, :]

    def kld_cost(mu_p, sig_p, mu_q, sig_q):
        return 0.5 * jnp.sum(2 * jnp.log(sig_p / sig_q) - 1
                             + (sig_q / sig_p) ** 2
                             + ((mu_p - mu_q) / sig_p) ** 2)

    kld = (kld_cost(0.0, prior_sigma, weight_mu, std_w)
           + kld_cost(0.0, 0.1, bias_mu, std_b))
    return logits, kld


if __name__ == "__main__":
    key = jax.random.PRNGKey(0)
    B, n_in, n_out = 8, 32, 8          # (batch, last_hidden_dim) -> n_output_heads
    prior_sigma = 0.1

    k = jax.random.split(key, 7)
    x = jax.random.normal(k[0], (B, n_in), dtype=jnp.float32)
    # Deterministic parameter init per BBPOutputLayer.initialize():
    weight_mu = jax.random.uniform(k[1], (n_in, n_out), minval=-0.1, maxval=0.1)
    bias_mu = jax.random.uniform(k[2], (n_out,), minval=-0.1, maxval=0.1)
    weight_rho = jax.random.uniform(k[3], (n_in, n_out), minval=-3.0, maxval=-2.0)
    bias_rho = jax.random.uniform(k[4], (n_out,), minval=-3.0, maxval=-2.0)
    # Reparameterization noise (torch draws this with .normal_() inside forward).
    eps_w = jax.random.normal(k[5], (B, n_out), dtype=jnp.float32)
    eps_b = jax.random.normal(k[6], (n_out,), dtype=jnp.float32)

    # f32 MXU path (tight tolerance) and bf16 MXU path (perf config, loose tolerance).
    logits_f32, kld_f32 = bbp_output_layer(x, weight_mu, weight_rho, bias_mu, bias_rho,
                                           eps_w, eps_b, prior_sigma, use_bf16=False)
    logits_bf16, kld_bf16 = bbp_output_layer(x, weight_mu, weight_rho, bias_mu, bias_rho,
                                             eps_w, eps_b, prior_sigma, use_bf16=True)
    jax.block_until_ready((logits_f32, kld_f32, logits_bf16, kld_bf16))

    ref_logits, ref_kld = reference(x, weight_mu, weight_rho, bias_mu, bias_rho,
                                    eps_w, eps_b, prior_sigma)

    assert logits_f32.shape == (B, n_out)
    assert jnp.allclose(logits_f32, ref_logits, atol=1e-4, rtol=1e-4)
    assert jnp.allclose(kld_f32, ref_kld, atol=1e-3, rtol=1e-4)
    assert jnp.allclose(kld_bf16, ref_kld, atol=1e-3, rtol=1e-4)
    assert jnp.allclose(logits_bf16, ref_logits, atol=2e-2, rtol=2e-2)

    print("KERNEL_OK")
</pallas_src>

<mosaic_0001>
module attributes {stable_mosaic.version = 11 : i64} {
  func.func @kld_kernel(%arg0: i32, %arg1: memref<32x8xf32, #tpu.memory_space<vmem>>, %arg2: memref<32x8xf32, #tpu.memory_space<vmem>>, %arg3: memref<1x1xf32, #tpu.memory_space<smem>>, %arg4: memref<1xf32, #tpu.memory_space<smem>>) attributes {dimension_semantics = [#tpu.dimension_semantics<arbitrary>], iteration_bounds = array<i64: 1>, scalar_prefetch = 0 : i64, scratch_operands = 1 : i64, tpu.core_type = #tpu.core_type<tc>, window_params = [{transform_indices = @transform_0, window_bounds = array<i64: 32, 8>}, {transform_indices = @transform_1, window_bounds = array<i64: 32, 8>}, {transform_indices = @transform_2, window_bounds = array<i64: 1, 1>}]} {
    %c0_i32 = arith.constant 0 : i32
    %0 = arith.cmpi eq, %arg0, %c0_i32 : i32
    %1 = arith.extui %0 : i1 to i32
    %c0_i32_0 = arith.constant 0 : i32
    %2 = arith.cmpi ne, %1, %c0_i32_0 : i32
    scf.if %2 {
      %cst_13 = arith.constant 0.000000e+00 : f32
      %c0_14 = arith.constant 0 : index
      %33 = memref.load %arg4[%c0_14] : memref<1xf32, #tpu.memory_space<smem>>
      memref.store %cst_13, %arg4[%c0_14] : memref<1xf32, #tpu.memory_space<smem>>
    } else {
    }
    %c0 = arith.constant 0 : index
    %c0_1 = arith.constant 0 : index
    %3 = vector.load %arg1[%c0, %c0_1] : memref<32x8xf32, #tpu.memory_space<vmem>>, vector<32x8xf32>
    %c0_2 = arith.constant 0 : index
    %c0_3 = arith.constant 0 : index
    %4 = vector.load %arg2[%c0_2, %c0_3] : memref<32x8xf32, #tpu.memory_space<vmem>>, vector<32x8xf32>
    %cst = arith.constant 2.000000e+01 : f32
    %5 = vector.broadcast %cst : f32 to vector<32x8xf32>
    %6 = arith.cmpf ogt, %4, %5 : vector<32x8xf32>
    %cst_4 = arith.constant 2.000000e+01 : f32
    %7 = vector.broadcast %cst_4 : f32 to vector<32x8xf32>
    %8 = arith.minimumf %4, %7 : vector<32x8xf32>
    %9 = math.exp %8 : vector<32x8xf32>
    %10 = math.log1p %9 : vector<32x8xf32>
    %11 = arith.select %6, %4, %10 : vector<32x8xi1>, vector<32x8xf32>
    %cst_5 = arith.constant 9.99999997E-7 : f32
    %12 = vector.broadcast %cst_5 : f32 to vector<32x8xf32>
    %13 = arith.addf %12, %11 : vector<32x8xf32>
    %c0_6 = arith.constant 0 : index
    %14 = memref.load %arg4[%c0_6] : memref<1xf32, #tpu.memory_space<smem>>
    %15 = math.log %13 : vector<32x8xf32>
    %cst_7 = arith.constant -2.000000e+00 : f32
    %16 = vector.broadcast %cst_7 : f32 to vector<32x8xf32>
    %17 = arith.mulf %16, %15 : vector<32x8xf32>
    %18 = arith.mulf %13, %13 : vector<32x8xf32>
    %19 = arith.mulf %3, %3 : vector<32x8xf32>
    %20 = arith.addf %18, %19 : vector<32x8xf32>
    %cst_8 = arith.constant 1.000000e+02 : f32
    %21 = vector.broadcast %cst_8 : f32 to vector<32x8xf32>
    %22 = arith.mulf %20, %21 : vector<32x8xf32>
    %23 = arith.addf %17, %22 : vector<32x8xf32>
    %24 = vector.shape_cast %23 : vector<32x8xf32> to vector<1x32x8xf32>
    %cst_9 = arith.constant dense<0.000000e+00> : vector<1xf32>
    %25 = vector.multi_reduction <add>, %24, %cst_9 [1, 2] : vector<1x32x8xf32> to vector<1xf32>
    %26 = vector.shape_cast %25 : vector<1xf32> to vector<1x1x1xf32>
    %27 = vector.extract %26[0, 0, 0] : f32 from vector<1x1x1xf32>
    %28 = arith.addf %14, %27 : f32
    %c0_10 = arith.constant 0 : index
    %29 = memref.load %arg4[%c0_10] : memref<1xf32, #tpu.memory_space<smem>>
    memref.store %28, %arg4[%c0_10] : memref<1xf32, #tpu.memory_space<smem>>
    %c0_i32_11 = arith.constant 0 : i32
    %30 = arith.cmpi eq, %arg0, %c0_i32_11 : i32
    %31 = arith.extui %30 : i1 to i32
    %c0_i32_12 = arith.constant 0 : i32
    %32 = arith.cmpi ne, %31, %c0_i32_12 : i32
    scf.if %32 {
      %c0_13 = arith.constant 0 : index
      %33 = memref.load %arg4[%c0_13] : memref<1xf32, #tpu.memory_space<smem>>
      %c0_14 = arith.constant 0 : index
      %c0_15 = arith.constant 0 : index
      %34 = memref.load %arg3[%c0_14, %c0_15] : memref<1x1xf32, #tpu.memory_space<smem>>
      memref.store %33, %arg3[%c0_14, %c0_15] : memref<1x1xf32, #tpu.memory_space<smem>>
    } else {
    }
    return
  }
  func.func @transform_0(%arg0: i32) -> (i32, i32) {
    %c0_i32 = arith.constant 0 : i32
    %c0_i32_0 = arith.constant 0 : i32
    return %arg0, %c0_i32 : i32, i32
  }
  func.func @transform_1(%arg0: i32) -> (i32, i32) {
    %c0_i32 = arith.constant 0 : i32
    %c0_i32_0 = arith.constant 0 : i32
    return %arg0, %c0_i32 : i32, i32
  }
  func.func @transform_2(%arg0: i32) -> (i32, i32) {
    %c0_i32 = arith.constant 0 : i32
    %c0_i32_0 = arith.constant 0 : i32
    %c0_i32_1 = arith.constant 0 : i32
    return %c0_i32, %c0_i32_0 : i32, i32
  }
}

</mosaic_0001>

<llo_original>
// kernel: tpu_custom_call.1
$region0: #{tpu_custom_call.1}
  #allocation0 [shape = 'u32[]', space=smem, size = 0x4, offset = 0x4, fixed_abs, tag = 'smem constant byte address 0x4 - core index']
  #allocation1 [shape = 'u32[144,128]{1,0:T(1,128)}', space=vmem, size = 0x12000, scoped, tag = 'internal scratch']
  #allocation2 [shape = 'f32[1]{0:T(128)}', space=smem, size = 0x200, scoped, tag = 'scratch operand']
  %s0 = inlined_call_operand.vmem [shape: f32[32,8], index: 0, kind: input, shape index: {}]
  %s1 = inlined_call_operand.vmem [shape: f32[32,8], index: 1, kind: input, shape index: {}]
  %s2 = inlined_call_operand.hbm [shape: f32[1,1], index: 2, kind: output, shape index: {}]
  %s3 = sld [smem:[#allocation0]]
  $region26: #{tpu_custom_call.1} parent=0
    _
  %s5 = ssub.s32 1, %s3
  %s6 = scalar_select 0, %s5, %s3
  $region1: #{tpu_custom_call.1} parent=0
    #allocation3 [shape = 'u8[512]{0}', space=smem, size = 0x200, scoped, tag = 'output window, operand 0, single buffered']
    #allocation4 [shape = 's32[1]{0}', space=sflag, size = 0x4, scoped, tag = 'scoped memory for tpu_custom_call.1']
    %7 = vsyncpa [#allocation4], 0
    // Predicated region
    $region2: #{tpu_custom_call.1} parent=1 // pred_check
      _
    $region3: #{tpu_custom_call.1} parent=1 // pred_check_branch
      %9 = sbr.rel (0) target = $region5
    $region4: #{tpu_custom_call.1} parent=1 // pred_region
      _
    $region5: #{tpu_custom_call.1} parent=1 // pred_fallthru
      _
    // Predicated region
    $region6: #{tpu_custom_call.1} parent=1 // pred_check
      _
    $region7: #{tpu_custom_call.1} parent=1 // pred_check_branch
      %11 = sbr.rel (0) target = $region9
    $region8: #{tpu_custom_call.1} parent=1 // pred_region
      _
    $region9: #{tpu_custom_call.1} parent=1 // pred_fallthru
      _
    %p12 = scmp.eq.s32.totalorder 0, 0
    // Predicated region
    $region10: #{tpu_custom_call.1} parent=1 // pred_check
      %p13 = pneg %p12
    $region11: #{tpu_custom_call.1} parent=1 // pred_check_branch
      %15 = sbr.rel (%p13) target = $region13
    $region12: #{tpu_custom_call.1} parent=1 // pred_region
      %s16 = scalar_lea.smem [#allocation2], 0
      %17 = sst [smem:[%s16]] 0.0
    $region13: #{tpu_custom_call.1} parent=1 // pred_fallthru
      _
    %v18 = vld [vmem:[%s0] sm:$0xff]
    %v19 = vld [vmem:[%s0 + $0x8] sm:$0xff]
    %v20 = vld [vmem:[%s0 + $0x10] sm:$0xff]
    %v21 = vld [vmem:[%s0 + $0x18] sm:$0xff]
    %v22 = vld [vmem:[%s1] sm:$0xff]
    %v23 = vld [vmem:[%s1 + $0x8] sm:$0xff]
    %v24 = vld [vmem:[%s1 + $0x10] sm:$0xff]
    %v25 = vld [vmem:[%s1 + $0x18] sm:$0xff]
    %vm26 = vcmp.gt.f32.partialorder %v22, 20.0
    %vm27 = vcmp.gt.f32.partialorder %v23, 20.0
    %vm28 = vcmp.gt.f32.partialorder %v24, 20.0
    %vm29 = vcmp.gt.f32.partialorder %v25, 20.0
    %v30 = vmin.f32 %v22, 20.0
    %v31 = vmin.f32 %v23, 20.0
    %v32 = vmin.f32 %v24, 20.0
    %v33 = vmin.f32 %v25, 20.0
    %v34 = vmul.f32 %v30, 1.442695
    %v35 = vpow.pop %v34
    %v36 = vmul.f32 %v31, 1.442695
    %v37 = vpow.pop %v36
    %v38 = vmul.f32 %v32, 1.442695
    %v39 = vpow.pop %v38
    %v40 = vmul.f32 %v33, 1.442695
    %v41 = vpow.pop %v40
    %v42 = vadd.f32 %v35, 1.0
    %v43 = vlog2.pop %v42
    %v44 = vmul.f32 %v43, 0.6931472
    %v45 = vmul.f32 -0.5, %v35
    %v46 = vadd.f32 %v45, 1.0
    %v47 = vmul.f32 %v46, %v35
    %v48 = vand.u32 2147483647, %v35
    %vm49 = vcmp.lt.f32.partialorder %v48, 0.0004427343
    %v50 = vsel %vm49, %v47, %v44
    %v51 = vadd.f32 %v37, 1.0
    %v52 = vlog2.pop %v51
    %v53 = vmul.f32 %v52, 0.6931472
    %v54 = vmul.f32 -0.5, %v37
    %v55 = vadd.f32 %v54, 1.0
    %v56 = vmul.f32 %v55, %v37
    %v57 = vand.u32 2147483647, %v37
    %vm58 = vcmp.lt.f32.partialorder %v57, 0.0004427343
    %v59 = vsel %vm58, %v56, %v53
    %v60 = vadd.f32 %v39, 1.0
    %v61 = vlog2.pop %v60
    %v62 = vmul.f32 %v61, 0.6931472
    %v63 = vmul.f32 -0.5, %v39
    %v64 = vadd.f32 %v63, 1.0
    %v65 = vmul.f32 %v64, %v39
    %v66 = vand.u32 2147483647, %v39
    %vm67 = vcmp.lt.f32.partialorder %v66, 0.0004427343
    %v68 = vsel %vm67, %v65, %v62
    %v69 = vadd.f32 %v41, 1.0
    %v70 = vlog2.pop %v69
    %v71 = vmul.f32 %v70, 0.6931472
    %v72 = vmul.f32 -0.5, %v41
    %v73 = vadd.f32 %v72, 1.0
    %v74 = vmul.f32 %v73, %v41
    %v75 = vand.u32 2147483647, %v41
    %vm76 = vcmp.lt.f32.partialorder %v75, 0.0004427343
    %v77 = vsel %vm76, %v74, %v71
    %v78 = vsel %vm26, %v22, %v50
    %v79 = vsel %vm27, %v23, %v59
    %v80 = vsel %vm28, %v24, %v68
    %v81 = vsel %vm29, %v25, %v77
    %v82 = vadd.f32 %v78, 1e-06
    %v83 = vadd.f32 %v79, 1e-06
    %v84 = vadd.f32 %v80, 1e-06
    %v85 = vadd.f32 %v81, 1e-06
    %s86 = sld [smem:[#allocation2]]
    %v87 = vlog2.pop %v82
    %v88 = vmul.f32 %v87, 0.6931472
    %v89 = vlog2.pop %v83
    %v90 = vmul.f32 %v89, 0.6931472
    %v91 = vlog2.pop %v84
    %v92 = vmul.f32 %v91, 0.6931472
    %v93 = vlog2.pop %v85
    %v94 = vmul.f32 %v93, 0.6931472
    %v95 = vmul.f32 %v88, -2.0
    %v96 = vmul.f32 %v90, -2.0
    %v97 = vmul.f32 %v92, -2.0
    %v98 = vmul.f32 %v94, -2.0
    %v99 = vmul.f32 %v82, %v82
    %v100 = vmul.f32 %v83, %v83
    %v101 = vmul.f32 %v84, %v84
    %v102 = vmul.f32 %v85, %v85
    %v103 = vmul.f32 %v18, %v18
    %v104 = vmul.f32 %v19, %v19
    %v105 = vmul.f32 %v20, %v20
    %v106 = vmul.f32 %v21, %v21
    %v107 = vadd.f32 %v99, %v103
    %v108 = vadd.f32 %v100, %v104
    %v109 = vadd.f32 %v101, %v105
    %v110 = vadd.f32 %v102, %v106
    %v111 = vmul.f32 %v107, 100.0
    %v112 = vmul.f32 %v108, 100.0
    %v113 = vmul.f32 %v109, 100.0
    %v114 = vmul.f32 %v110, 100.0
    %v115 = vadd.f32 %v95, %v111
    %v116 = vadd.f32 %v96, %v112
    %v117 = vadd.f32 %v97, %v113
    %v118 = vadd.f32 %v98, %v114
    %vm119 = vcmask 64512
    %v120 = vsel %vm119, %v115, 0.0
    %v121 = vsel %vm119, %v116, 0.0
    %v122 = vadd.f32 %v120, %v121
    %v123 = vsel %vm119, %v117, 0.0
    %v124 = vadd.f32 %v122, %v123
    %v125 = vsel %vm119, %v118, 0.0
    %v126 = vadd.f32 %v124, %v125
    %127 = vadd.xlane.f32.xlu0 %v126
    %v128 = vpop.xlane.xlu0 %127
    %v129 = vrot.slane %v128, 4
    %v130 = vadd.f32 %v128, %v129
    %v131 = vrot.slane %v130, 2
    %v132 = vadd.f32 %v130, %v131
    %v133 = vrot.slane %v132, 1
    %v134 = vadd.f32 %v132, %v133
    %s135 = vtos %v134
    %s136 = sadd.f32 %s86, %s135
    %s137 = scalar_lea.smem [#allocation2], 0
    %138 = sst [smem:[%s137]] %s136
    // Predicated region
    $region14: #{tpu_custom_call.1} parent=1 // pred_check
      %p139 = pneg %p12
    $region15: #{tpu_custom_call.1} parent=1 // pred_check_branch
      %141 = sbr.rel (%p139) target = $region17
    $region16: #{tpu_custom_call.1} parent=1 // pred_region
      %s142 = sld [smem:[#allocation2]]
      %s143 = scalar_lea.smem [#allocation3], 0
      %144 = sst [smem:[%s143]] %s142
    $region17: #{tpu_custom_call.1} parent=1 // pred_fallthru
      _
    // Predicated region
    $region18: #{tpu_custom_call.1} parent=1 // pred_check
      _
    $region19: #{tpu_custom_call.1} parent=1 // pred_check_branch
      %146 = sbr.rel (0) target = $region21
    $region20: #{tpu_custom_call.1} parent=1 // pred_region
      %s148 = ssub.s32 16, 16
      %149 = vsyncadd [#allocation4], %s148
      %152 = dma.smem_to_hbm [#allocation3], 16, %s2, [#allocation4]
    $region21: #{tpu_custom_call.1} parent=1 // pred_fallthru
      _
    // Predicated region
    $region22: #{tpu_custom_call.1} parent=1 // pred_check
      _
    $region23: #{tpu_custom_call.1} parent=1 // pred_check_branch
      %154 = sbr.rel (0) target = $region25
    $region24: #{tpu_custom_call.1} parent=1 // pred_region
      %155 = dma.done [#allocation4], 16
    $region25: #{tpu_custom_call.1} parent=1 // pred_fallthru
      _
    %156 = sfence
    %157 = vsyncpa [#allocation4], 1

</llo_original>
